<compile_context>
chip_gen: v7x
topology: tpu7x:2x2x1
jax: 0.10.0
libtpu: 0.0.40
codegen_flags: <defaults>
</compile_context>

<pallas_src>
import functools

import jax
import jax.numpy as jnp
from jax.experimental import pallas as pl
from jax.experimental.pallas import tpu as pltpu

LANE = 128          # vreg lane width
ROW_ALIGN = 16      # bf16 native sublane packing (also satisfies f32's 8)
MAX_TILE_B = 1024   # large tiles amortize the ~0.35 us per-grid-step overhead


def _round_up(n, m):
    return ((n + m - 1) // m) * m


def actor_kernel(x_ref,
                 w1_ref, b1_ref,
                 w2_ref, b2_ref,
                 w3_ref, b3_ref,
                 w4_ref, b4_ref,
                 out_ref,
                 *, max_action, hidden_dtype):
    """Fused 4-layer MLP over one (tile_b, state_dim) batch tile.

    bf16 MXU operands with f32 accumulation.  Hidden bias/ReLU epilogues run
    in `hidden_dtype` (bf16 on v6e/v7x, f32 on v5e); the final bias/tanh/scale
    epilogue stays in f32.
    """
    x = x_ref[...].astype(jnp.bfloat16)              # (tile_b, state_dim)

    def hidden_layer(h_bf16, w_ref, b_ref):
        acc = jnp.dot(h_bf16, w_ref[...], preferred_element_type=jnp.float32)
        acc = acc.astype(hidden_dtype) + b_ref[...].astype(hidden_dtype)
        return jnp.maximum(acc, 0).astype(jnp.bfloat16)

    h = hidden_layer(x, w1_ref, b1_ref)
    h = hidden_layer(h, w2_ref, b2_ref)
    h = hidden_layer(h, w3_ref, b3_ref)

    acc = jnp.dot(h, w4_ref[...], preferred_element_type=jnp.float32) + b4_ref[...]
    out_ref[...] = (max_action * jnp.tanh(acc)).astype(out_ref.dtype)


def init_actor_params(key, state_dim, action_dim, hidden_dim=256):
    """PyTorch-style uniform(-1/sqrt(fan_in), 1/sqrt(fan_in)) init (f32).

    Weights are stored (in_features, out_features) — the transpose of
    torch.nn.Linear.weight — so the kernel computes x @ W directly.
    """
    dims = [(state_dim, hidden_dim),
            (hidden_dim, hidden_dim),
            (hidden_dim, hidden_dim),
            (hidden_dim, action_dim)]
    params = {}
    for i, (fan_in, fan_out) in enumerate(dims, start=1):
        key, kw, kb = jax.random.split(key, 3)
        bound = 1.0 / jnp.sqrt(jnp.float32(fan_in))
        params[f"w{i}"] = jax.random.uniform(
            kw, (fan_in, fan_out), jnp.float32, minval=-bound, maxval=bound)
        params[f"b{i}"] = jax.random.uniform(
            kb, (1, fan_out), jnp.float32, minval=-bound, maxval=bound)
    return params


def prepare_actor_params(params):
    """One-time host-side prep: zero-pad hidden/action dims to multiples of
    128 and cast weights to bf16 (biases stay f32).

    w1 rows stay at state_dim (unpadded) so the kernel can consume the raw f32
    state directly.  Padded hidden units have zero in-weights and zero bias,
    so ReLU leaves them at 0 and the zero rows of the next weight ignore them;
    padded action columns produce tanh(0) * max_action = 0 and are sliced off
    by the caller.
    """
    state_dim, hidden = params["w1"].shape
    action_dim = params["w4"].shape[1]

    Hp = _round_up(hidden, LANE)
    Ap = _round_up(action_dim, LANE)

    def pad2(x, rows, cols):
        return jnp.pad(x, ((0, rows - x.shape[0]), (0, cols - x.shape[1])))

    prepped = {
        "w1": pad2(params["w1"], state_dim, Hp).astype(jnp.bfloat16),
        "b1": pad2(params["b1"], 1, Hp).astype(jnp.float32),
        "w2": pad2(params["w2"], Hp, Hp).astype(jnp.bfloat16),
        "b2": pad2(params["b2"], 1, Hp).astype(jnp.float32),
        "w3": pad2(params["w3"], Hp, Hp).astype(jnp.bfloat16),
        "b3": pad2(params["b3"], 1, Hp).astype(jnp.float32),
        "w4": pad2(params["w4"], Hp, Ap).astype(jnp.bfloat16),
        "b4": pad2(params["b4"], 1, Ap).astype(jnp.float32),
    }
    meta = {"state_dim": state_dim, "action_dim": action_dim,
            "Hp": Hp, "Ap": Ap}
    return prepped, meta


def _choose_batch_tiling(B):
    """Pick (tile_b, num_tiles).

    tile_b: as large as possible (<= MAX_TILE_B), multiple of 16, sized from B
    (not a fixed constant) so batch padding is minimal.  num_tiles >= 2 when
    the batch is big enough, preferring an even count so both v7x TensorCores
    get equal work via the 'parallel' batch axis.
    """
    b16 = _round_up(max(B, 1), ROW_ALIGN)
    if b16 <= 2 * ROW_ALIGN:
        return b16, 1                              # tiny batch: single tile
    num_tiles = max(2, pl.cdiv(b16, MAX_TILE_B))
    if num_tiles > 2 and num_tiles % 2 == 1:
        num_tiles += 1                             # even split across 2 TCs
    tile_b = _round_up(pl.cdiv(B, num_tiles), ROW_ALIGN)
    num_tiles = pl.cdiv(B, tile_b)
    return tile_b, num_tiles


def _hidden_epilogue_dtype():
    kind = jax.devices()[0].device_kind.lower()
    # Packed bf16 VALUs exist on v6e / v7x; keep the f32 epilogue on v5e and
    # older (no bf16 VPU -> bf16 would lower to unpack/compute/repack).
    return jnp.bfloat16 if ("v6" in kind or "v7" in kind) else jnp.float32


def actor_forward(state, prepped, meta, max_action):
    """state: (B, state_dim) f32. Returns (B, action_dim) f32."""
    B, state_dim = state.shape
    assert state_dim == meta["state_dim"]
    Hp, Ap = meta["Hp"], meta["Ap"]
    action_dim = meta["action_dim"]

    tile_b, num_tiles = _choose_batch_tiling(B)
    Bp = tile_b * num_tiles

    # Stream the raw f32 state; only the batch rows get (minimally) padded.
    x = state if Bp == B else jnp.pad(state, ((0, Bp - B), (0, 0)))

    kernel = functools.partial(actor_kernel,
                               max_action=float(max_action),
                               hidden_dtype=_hidden_epilogue_dtype())

    # Advisory cost so XLA can schedule/overlap around the custom call.
    flops = 2 * Bp * (state_dim * Hp + 2 * Hp * Hp + Hp * Ap)
    bytes_accessed = (Bp * state_dim * 4 + Bp * Ap * 2
                      + sum(int(v.size) * v.dtype.itemsize
                            for v in prepped.values()))
    cost = pl.CostEstimate(flops=flops, transcendentals=Bp * Ap,
                           bytes_accessed=bytes_accessed)

    def resident(shape):
        # Weights / biases: full-array block, constant index -> fetched once,
        # stay VMEM-resident across all grid steps.
        # (pl.Buffered(1) would also drop the redundant second buffer; skipped
        #  as pure hygiene since total VMEM use here is only a few MiB.)
        return pl.BlockSpec(shape, lambda i: (0, 0))

    out_padded = pl.pallas_call(
        kernel,
        out_shape=jax.ShapeDtypeStruct((Bp, Ap), jnp.bfloat16),
        grid=(num_tiles,),
        in_specs=[
            # Pipelined raw-f32 state tile; last dim == full array dim (legal
            # even though < 128), cast to bf16 inside the kernel.
            pl.BlockSpec((tile_b, state_dim), lambda i: (i, 0)),
            resident((state_dim, Hp)), resident((1, Hp)),
            resident((Hp, Hp)), resident((1, Hp)),
            resident((Hp, Hp)), resident((1, Hp)),
            resident((Hp, Ap)), resident((1, Ap)),
        ],
        out_specs=pl.BlockSpec((tile_b, Ap), lambda i: (i, 0)),
        compiler_params=pltpu.CompilerParams(
            dimension_semantics=("parallel",)),   # megacore shard on v7x
        cost_estimate=cost,
    )(x,
      prepped["w1"], prepped["b1"],
      prepped["w2"], prepped["b2"],
      prepped["w3"], prepped["b3"],
      prepped["w4"], prepped["b4"])

    # Tiny epilogue outside the kernel: slice padding off and restore f32.
    return out_padded[:B, :action_dim].astype(jnp.float32)


def actor_reference(state, params, max_action):
    """Pure-JAX f32 reference of the PyTorch forward for validation."""
    h = jnp.maximum(state @ params["w1"] + params["b1"], 0.0)
    h = jnp.maximum(h @ params["w2"] + params["b2"], 0.0)
    h = jnp.maximum(h @ params["w3"] + params["b3"], 0.0)
    return max_action * jnp.tanh(h @ params["w4"] + params["b4"])


if __name__ == "__main__":
    key = jax.random.PRNGKey(0)

    batch = 2              # tiny-batch / single-tile path
    state_dim = 8
    action_dim = 4
    hidden_dim = 256       # module default (nn.Linear(., 256) x3)
    max_action = 2.0

    key, k_state = jax.random.split(key)
    state = jax.random.normal(k_state, (batch, state_dim), jnp.float32)

    params = init_actor_params(key, state_dim, action_dim, hidden_dim)
    prepped, meta = prepare_actor_params(params)

    out = actor_forward(state, prepped, meta, max_action)
    out = jax.block_until_ready(out)

    ref = actor_reference(state, params, max_action)
    assert out.shape == (batch, action_dim)
    # bf16 MXU operands / bf16 output with f32 accumulation -> loose tolerance.
    assert jnp.allclose(out, ref, atol=5e-2, rtol=5e-2), "mismatch vs reference"

    # Exercise the multi-tile grid (B=300 -> tile_b=160, 2 parallel steps,
    # only 20 padded rows) and the batch-padding path.
    key, k_big = jax.random.split(key)
    big_state = jax.random.normal(k_big, (300, state_dim), jnp.float32)
    big_out = jax.block_until_ready(
        actor_forward(big_state, prepped, meta, max_action))
    big_ref = actor_reference(big_state, params, max_action)
    assert big_out.shape == (300, action_dim)
    assert jnp.allclose(big_out, big_ref, atol=5e-2, rtol=5e-2), \
        "mismatch vs reference (batched grid)"

    print("KERNEL_OK")
</pallas_src>

<mosaic_0001>
module attributes {stable_mosaic.version = 11 : i64} {
  func.func @actor_kernel(%arg0: i32, %arg1: memref<16x8xf32, #tpu.memory_space<vmem>>, %arg2: memref<8x256xbf16, #tpu.memory_space<vmem>>, %arg3: memref<1x256xf32, #tpu.memory_space<vmem>>, %arg4: memref<256x256xbf16, #tpu.memory_space<vmem>>, %arg5: memref<1x256xf32, #tpu.memory_space<vmem>>, %arg6: memref<256x256xbf16, #tpu.memory_space<vmem>>, %arg7: memref<1x256xf32, #tpu.memory_space<vmem>>, %arg8: memref<256x128xbf16, #tpu.memory_space<vmem>>, %arg9: memref<1x128xf32, #tpu.memory_space<vmem>>, %arg10: memref<16x128xbf16, #tpu.memory_space<vmem>>) attributes {dimension_semantics = [#tpu.dimension_semantics<parallel>], iteration_bounds = array<i64: 1>, scalar_prefetch = 0 : i64, scratch_operands = 0 : i64, tpu.core_type = #tpu.core_type<tc>, window_params = [{transform_indices = @transform_0, window_bounds = array<i64: 16, 8>}, {pipeline_mode = #tpu.pipeline_mode<synchronous>, transform_indices = @transform_1, window_bounds = array<i64: 8, 256>}, {pipeline_mode = #tpu.pipeline_mode<synchronous>, transform_indices = @transform_2, window_bounds = array<i64: 1, 256>}, {pipeline_mode = #tpu.pipeline_mode<synchronous>, transform_indices = @transform_3, window_bounds = array<i64: 256, 256>}, {pipeline_mode = #tpu.pipeline_mode<synchronous>, transform_indices = @transform_4, window_bounds = array<i64: 1, 256>}, {pipeline_mode = #tpu.pipeline_mode<synchronous>, transform_indices = @transform_5, window_bounds = array<i64: 256, 256>}, {pipeline_mode = #tpu.pipeline_mode<synchronous>, transform_indices = @transform_6, window_bounds = array<i64: 1, 256>}, {pipeline_mode = #tpu.pipeline_mode<synchronous>, transform_indices = @transform_7, window_bounds = array<i64: 256, 128>}, {pipeline_mode = #tpu.pipeline_mode<synchronous>, transform_indices = @transform_8, window_bounds = array<i64: 1, 128>}, {transform_indices = @transform_9, window_bounds = array<i64: 16, 128>}]} {
    %c0 = arith.constant 0 : index
    %c0_0 = arith.constant 0 : index
    %0 = vector.load %arg1[%c0, %c0_0] : memref<16x8xf32, #tpu.memory_space<vmem>>, vector<16x8xf32>
    %1 = arith.truncf %0 : vector<16x8xf32> to vector<16x8xbf16>
    %c0_1 = arith.constant 0 : index
    %c0_2 = arith.constant 0 : index
    %2 = vector.load %arg2[%c0_1, %c0_2] : memref<8x256xbf16, #tpu.memory_space<vmem>>, vector<8x256xbf16>
    %cst = arith.constant dense<0.000000e+00> : vector<16x256xf32>
    %3 = tpu.matmul %1, %2, %cst {dimension_numbers = #tpu.dot_dimension_numbers<[1], [0], [0], [1], [0, 0, 1, 1], [], []>} : vector<16x8xbf16>, vector<8x256xbf16>, vector<16x256xf32> -> vector<16x256xf32>
    %c0_3 = arith.constant 0 : index
    %c0_4 = arith.constant 0 : index
    %4 = vector.load %arg3[%c0_3, %c0_4] : memref<1x256xf32, #tpu.memory_space<vmem>>, vector<1x256xf32>
    %5 = vector.broadcast %4 : vector<1x256xf32> to vector<16x256xf32>
    %6 = arith.addf %3, %5 : vector<16x256xf32>
    %cst_5 = arith.constant 0.000000e+00 : f32
    %7 = vector.broadcast %cst_5 : f32 to vector<16x256xf32>
    %8 = arith.maximumf %6, %7 : vector<16x256xf32>
    %9 = arith.truncf %8 : vector<16x256xf32> to vector<16x256xbf16>
    %c0_6 = arith.constant 0 : index
    %c0_7 = arith.constant 0 : index
    %10 = vector.load %arg4[%c0_6, %c0_7] : memref<256x256xbf16, #tpu.memory_space<vmem>>, vector<256x256xbf16>
    %cst_8 = arith.constant dense<0.000000e+00> : vector<16x256xf32>
    %11 = tpu.matmul %9, %10, %cst_8 {dimension_numbers = #tpu.dot_dimension_numbers<[1], [0], [0], [1], [0, 0, 1, 1], [], []>} : vector<16x256xbf16>, vector<256x256xbf16>, vector<16x256xf32> -> vector<16x256xf32>
    %c0_9 = arith.constant 0 : index
    %c0_10 = arith.constant 0 : index
    %12 = vector.load %arg5[%c0_9, %c0_10] : memref<1x256xf32, #tpu.memory_space<vmem>>, vector<1x256xf32>
    %13 = vector.broadcast %12 : vector<1x256xf32> to vector<16x256xf32>
    %14 = arith.addf %11, %13 : vector<16x256xf32>
    %cst_11 = arith.constant 0.000000e+00 : f32
    %15 = vector.broadcast %cst_11 : f32 to vector<16x256xf32>
    %16 = arith.maximumf %14, %15 : vector<16x256xf32>
    %17 = arith.truncf %16 : vector<16x256xf32> to vector<16x256xbf16>
    %c0_12 = arith.constant 0 : index
    %c0_13 = arith.constant 0 : index
    %18 = vector.load %arg6[%c0_12, %c0_13] : memref<256x256xbf16, #tpu.memory_space<vmem>>, vector<256x256xbf16>
    %cst_14 = arith.constant dense<0.000000e+00> : vector<16x256xf32>
    %19 = tpu.matmul %17, %18, %cst_14 {dimension_numbers = #tpu.dot_dimension_numbers<[1], [0], [0], [1], [0, 0, 1, 1], [], []>} : vector<16x256xbf16>, vector<256x256xbf16>, vector<16x256xf32> -> vector<16x256xf32>
    %c0_15 = arith.constant 0 : index
    %c0_16 = arith.constant 0 : index
    %20 = vector.load %arg7[%c0_15, %c0_16] : memref<1x256xf32, #tpu.memory_space<vmem>>, vector<1x256xf32>
    %21 = vector.broadcast %20 : vector<1x256xf32> to vector<16x256xf32>
    %22 = arith.addf %19, %21 : vector<16x256xf32>
    %cst_17 = arith.constant 0.000000e+00 : f32
    %23 = vector.broadcast %cst_17 : f32 to vector<16x256xf32>
    %24 = arith.maximumf %22, %23 : vector<16x256xf32>
    %25 = arith.truncf %24 : vector<16x256xf32> to vector<16x256xbf16>
    %c0_18 = arith.constant 0 : index
    %c0_19 = arith.constant 0 : index
    %26 = vector.load %arg8[%c0_18, %c0_19] : memref<256x128xbf16, #tpu.memory_space<vmem>>, vector<256x128xbf16>
    %cst_20 = arith.constant dense<0.000000e+00> : vector<16x128xf32>
    %27 = tpu.matmul %25, %26, %cst_20 {dimension_numbers = #tpu.dot_dimension_numbers<[1], [0], [0], [1], [0, 0, 1, 1], [], []>} : vector<16x256xbf16>, vector<256x128xbf16>, vector<16x128xf32> -> vector<16x128xf32>
    %c0_21 = arith.constant 0 : index
    %c0_22 = arith.constant 0 : index
    %28 = vector.load %arg9[%c0_21, %c0_22] : memref<1x128xf32, #tpu.memory_space<vmem>>, vector<1x128xf32>
    %29 = vector.broadcast %28 : vector<1x128xf32> to vector<16x128xf32>
    %30 = arith.addf %27, %29 : vector<16x128xf32>
    %31 = math.tanh %30 : vector<16x128xf32>
    %cst_23 = arith.constant 2.000000e+00 : f32
    %32 = vector.broadcast %cst_23 : f32 to vector<16x128xf32>
    %33 = arith.mulf %32, %31 : vector<16x128xf32>
    %34 = arith.truncf %33 : vector<16x128xf32> to vector<16x128xbf16>
    %c0_24 = arith.constant 0 : index
    %c0_25 = arith.constant 0 : index
    %35 = vector.load %arg10[%c0_24, %c0_25] : memref<16x128xbf16, #tpu.memory_space<vmem>>, vector<16x128xbf16>
    tpu.vector_store %arg10[%c0_24, %c0_25], %34 {strides = array<i32>} : memref<16x128xbf16, #tpu.memory_space<vmem>>, vector<16x128xbf16>,
    return
  }
  func.func @transform_0(%arg0: i32) -> (i32, i32) {
    %c0_i32 = arith.constant 0 : i32
    %c0_i32_0 = arith.constant 0 : i32
    return %arg0, %c0_i32 : i32, i32
  }
  func.func @transform_1(%arg0: i32) -> (i32, i32) {
    %c0_i32 = arith.constant 0 : i32
    %c0_i32_0 = arith.constant 0 : i32
    %c0_i32_1 = arith.constant 0 : i32
    return %c0_i32, %c0_i32_0 : i32, i32
  }
  func.func @transform_2(%arg0: i32) -> (i32, i32) {
    %c0_i32 = arith.constant 0 : i32
    %c0_i32_0 = arith.constant 0 : i32
    %c0_i32_1 = arith.constant 0 : i32
    return %c0_i32, %c0_i32_0 : i32, i32
  }
  func.func @transform_3(%arg0: i32) -> (i32, i32) {
    %c0_i32 = arith.constant 0 : i32
    %c0_i32_0 = arith.constant 0 : i32
    %c0_i32_1 = arith.constant 0 : i32
    return %c0_i32, %c0_i32_0 : i32, i32
  }
  func.func @transform_4(%arg0: i32) -> (i32, i32) {
    %c0_i32 = arith.constant 0 : i32
    %c0_i32_0 = arith.constant 0 : i32
    %c0_i32_1 = arith.constant 0 : i32
    return %c0_i32, %c0_i32_0 : i32, i32
  }
  func.func @transform_5(%arg0: i32) -> (i32, i32) {
    %c0_i32 = arith.constant 0 : i32
    %c0_i32_0 = arith.constant 0 : i32
    %c0_i32_1 = arith.constant 0 : i32
    return %c0_i32, %c0_i32_0 : i32, i32
  }
  func.func @transform_6(%arg0: i32) -> (i32, i32) {
    %c0_i32 = arith.constant 0 : i32
    %c0_i32_0 = arith.constant 0 : i32
    %c0_i32_1 = arith.constant 0 : i32
    return %c0_i32, %c0_i32_0 : i32, i32
  }
  func.func @transform_7(%arg0: i32) -> (i32, i32) {
    %c0_i32 = arith.constant 0 : i32
    %c0_i32_0 = arith.constant 0 : i32
    %c0_i32_1 = arith.constant 0 : i32
    return %c0_i32, %c0_i32_0 : i32, i32
  }
  func.func @transform_8(%arg0: i32) -> (i32, i32) {
    %c0_i32 = arith.constant 0 : i32
    %c0_i32_0 = arith.constant 0 : i32
    %c0_i32_1 = arith.constant 0 : i32
    return %c0_i32, %c0_i32_0 : i32, i32
  }
  func.func @transform_9(%arg0: i32) -> (i32, i32) {
    %c0_i32 = arith.constant 0 : i32
    %c0_i32_0 = arith.constant 0 : i32
    return %arg0, %c0_i32 : i32, i32
  }
}

</mosaic_0001>

<llo_original>
// kernel: tpu_custom_call.1
$region0: #{tpu_custom_call.1}
  #allocation0 [shape = 'u32[]', space=smem, size = 0x4, offset = 0x4, fixed_abs, tag = 'smem constant byte address 0x4 - core index']
  #allocation1 [shape = 'u32[144,128]{1,0:T(1,128)}', space=vmem, size = 0x12000, scoped, tag = 'internal scratch']
  %s0 = inlined_call_operand.vmem [shape: f32[16,8], index: 0, kind: input, shape index: {}]
  %s1 = inlined_call_operand.vmem [shape: bf16[8,256], index: 1, kind: input, shape index: {}]
  %s2 = inlined_call_operand.vmem [shape: f32[1,256], index: 2, kind: input, shape index: {}]
  %s3 = inlined_call_operand.hbm [shape: bf16[256,256], index: 3, kind: input, shape index: {}]
  %s4 = inlined_call_operand.vmem [shape: f32[1,256], index: 4, kind: input, shape index: {}]
  %s5 = inlined_call_operand.hbm [shape: bf16[256,256], index: 5, kind: input, shape index: {}]
  %s6 = inlined_call_operand.vmem [shape: f32[1,256], index: 6, kind: input, shape index: {}]
  %s7 = inlined_call_operand.hbm [shape: bf16[256,128], index: 7, kind: input, shape index: {}]
  %s8 = inlined_call_operand.vmem [shape: f32[1,128], index: 8, kind: input, shape index: {}]
  %s9 = inlined_call_operand.hbm [shape: bf16[16,128], index: 9, kind: output, shape index: {}]
  %s10 = sld [smem:[#allocation0]]
  $region58: #{tpu_custom_call.1} parent=0
    _
  %s12 = ssub.s32 1, %s10
  %s13 = scalar_select 0, %s12, %s10
  $region1: #{tpu_custom_call.1} parent=0
    #allocation2 [shape = 'u8[131072]{0}', space=vmem, size = 0x20000, scoped, tag = 'input window, operand 3, single buffered']
    #allocation3 [shape = 's32[1]{0}', space=sflag, size = 0x4, scoped, tag = 'scoped memory for tpu_custom_call.1']
    #allocation4 [shape = 's32[1]{0}', space=sflag, size = 0x4, scoped, tag = 'scoped memory for tpu_custom_call.1']
    #allocation5 [shape = 'u8[131072]{0}', space=vmem, size = 0x20000, scoped, tag = 'input window, operand 5, single buffered']
    #allocation6 [shape = 's32[1]{0}', space=sflag, size = 0x4, scoped, tag = 'scoped memory for tpu_custom_call.1']
    #allocation7 [shape = 'u8[65536]{0}', space=vmem, size = 0x10000, scoped, tag = 'input window, operand 7, single buffered']
    #allocation8 [shape = 'u8[4096]{0}', space=vmem, size = 0x1000, scoped, tag = 'output window, operand 0, single buffered']
    %14 = vsyncpa [#allocation3], 0
    %15 = vsyncpa [#allocation6], 0
    %16 = vsyncpa [#allocation4], 0
    // Predicated region
    $region2: #{tpu_custom_call.1} parent=1 // pred_check
      _
    $region3: #{tpu_custom_call.1} parent=1 // pred_check_branch
      %18 = sbr.rel (0) target = $region5
    $region4: #{tpu_custom_call.1} parent=1 // pred_region
      _
    $region5: #{tpu_custom_call.1} parent=1 // pred_fallthru
      _
    // Predicated region
    $region6: #{tpu_custom_call.1} parent=1 // pred_check
      _
    $region7: #{tpu_custom_call.1} parent=1 // pred_check_branch
      %20 = sbr.rel (0) target = $region9
    $region8: #{tpu_custom_call.1} parent=1 // pred_region
      _
    $region9: #{tpu_custom_call.1} parent=1 // pred_fallthru
      _
    // Predicated region
    $region10: #{tpu_custom_call.1} parent=1 // pred_check
      _
    $region11: #{tpu_custom_call.1} parent=1 // pred_check_branch
      %22 = sbr.rel (0) target = $region13
    $region12: #{tpu_custom_call.1} parent=1 // pred_region
      _
    $region13: #{tpu_custom_call.1} parent=1 // pred_fallthru
      _
    // Predicated region
    $region14: #{tpu_custom_call.1} parent=1 // pred_check
      _
    $region15: #{tpu_custom_call.1} parent=1 // pred_check_branch
      %24 = sbr.rel (0) target = $region17
    $region16: #{tpu_custom_call.1} parent=1 // pred_region
      %s26 = ssub.s32 4096, 4096
      %27 = vsyncadd [#allocation3], %s26
      %s28 = sshll.u32 [#allocation2], 4
      %s29 = int_to_ptr.vmem [resolvable:$true] %s28
      %34 = dma.hbm_to_vmem [thread:$0]  %s3, 4096, %s29, [#allocation3], 128, 128, 8
    $region17: #{tpu_custom_call.1} parent=1 // pred_fallthru
      _
    // Predicated region
    $region18: #{tpu_custom_call.1} parent=1 // pred_check
      _
    $region19: #{tpu_custom_call.1} parent=1 // pred_check_branch
      %36 = sbr.rel (0) target = $region21
    $region20: #{tpu_custom_call.1} parent=1 // pred_region
      _
    $region21: #{tpu_custom_call.1} parent=1 // pred_fallthru
      _
    // Predicated region
    $region22: #{tpu_custom_call.1} parent=1 // pred_check
      _
    $region23: #{tpu_custom_call.1} parent=1 // pred_check_branch
      %38 = sbr.rel (0) target = $region25
    $region24: #{tpu_custom_call.1} parent=1 // pred_region
      %s40 = ssub.s32 4096, 4096
      %41 = vsyncadd [#allocation6], %s40
      %s42 = sshll.u32 [#allocation5], 4
      %s43 = int_to_ptr.vmem [resolvable:$true] %s42
      %48 = dma.hbm_to_vmem [thread:$0]  %s5, 4096, %s43, [#allocation6], 128, 128, 8
    $region25: #{tpu_custom_call.1} parent=1 // pred_fallthru
      _
    // Predicated region
    $region26: #{tpu_custom_call.1} parent=1 // pred_check
      _
    $region27: #{tpu_custom_call.1} parent=1 // pred_check_branch
      %50 = sbr.rel (0) target = $region29
    $region28: #{tpu_custom_call.1} parent=1 // pred_region
      _
    $region29: #{tpu_custom_call.1} parent=1 // pred_fallthru
      _
    // Predicated region
    $region30: #{tpu_custom_call.1} parent=1 // pred_check
      _
    $region31: #{tpu_custom_call.1} parent=1 // pred_check_branch
      %52 = sbr.rel (0) target = $region33
    $region32: #{tpu_custom_call.1} parent=1 // pred_region
      %s54 = ssub.s32 2048, 2048
      %55 = vsyncadd [#allocation6], %s54
      %s56 = sshll.u32 [#allocation7], 4
      %s57 = int_to_ptr.vmem [resolvable:$true] %s56
      %62 = dma.hbm_to_vmem [thread:$0]  %s7, 2048, %s57, [#allocation6], 64, 64, 4
    $region33: #{tpu_custom_call.1} parent=1 // pred_fallthru
      _
    // Predicated region
    $region34: #{tpu_custom_call.1} parent=1 // pred_check
      _
    $region35: #{tpu_custom_call.1} parent=1 // pred_check_branch
      %64 = sbr.rel (0) target = $region37
    $region36: #{tpu_custom_call.1} parent=1 // pred_region
      _
    $region37: #{tpu_custom_call.1} parent=1 // pred_fallthru
      _
    // Predicated region
    $region38: #{tpu_custom_call.1} parent=1 // pred_check
      _
    $region39: #{tpu_custom_call.1} parent=1 // pred_check_branch
      %66 = sbr.rel (0) target = $region41
    $region40: #{tpu_custom_call.1} parent=1 // pred_region
      %67 = dma.done [#allocation3], 4096
    $region41: #{tpu_custom_call.1} parent=1 // pred_fallthru
      _
    // Predicated region
    $region42: #{tpu_custom_call.1} parent=1 // pred_check
      _
    $region43: #{tpu_custom_call.1} parent=1 // pred_check_branch
      %69 = sbr.rel (0) target = $region45
    $region44: #{tpu_custom_call.1} parent=1 // pred_region
      %70 = dma.done [#allocation6], 4096
    $region45: #{tpu_custom_call.1} parent=1 // pred_fallthru
      _
    // Predicated region
    $region46: #{tpu_custom_call.1} parent=1 // pred_check
      _
    $region47: #{tpu_custom_call.1} parent=1 // pred_check_branch
      %72 = sbr.rel (0) target = $region49
    $region48: #{tpu_custom_call.1} parent=1 // pred_region
      %73 = dma.done [#allocation6], 2048
    $region49: #{tpu_custom_call.1} parent=1 // pred_fallthru
      _
    %v75 = vld [vmem:[%s0] sm:$0xff]
    %v76 = vld [vmem:[%s0 + $0x8] sm:$0xff]
    %v77 = vpack.c.bf16 %v76, %v75
    %v78 = vld [vmem:[%s1] sm:$0xff]
    %v79 = vld [vmem:[%s2] sm:$0x3]
    %v81 = vlaneseq
    %v82 = vshrl.u32 %v81, 7
    %v83 = vsub.s32 0, %v82
    %v84 = vrot.slane %v79, %v83
    %v85 = vlaneseq
    %v86 = vshrl.u32 %v85, 7
    %v87 = vsub.s32 1, %v86
    %v88 = vrot.slane %v79, %v87
    %v92 = vunpack.c.l.b16 %v78
    %v93 = vunpack.c.h.b16 %v78
    %v94 = vpack.c.b16 %v92, %v92
    %v95 = vpack.c.b16 %v93, %v93
    %vm96 = vcmask 64512
    %v98 = vsel %vm96, %v77, 0
    %vm100 = vcmask 1043456
    %v102 = vsel %vm100, %v94, 0
    %v105 = vsel %vm100, %v95, 0
    %107 = vmatprep.subr.bf16.mxu0 %v105
    %108 = vmatpush1.bf16.msra.mxu0 %v102
    %109 = vmatprep.subr.bf16.mxu0 0
    %110 = vmatpush1.bf16.msra.mxu0 0
    %111 = vmatprep.subr.bf16.mxu0 0
    %112 = vmatpush1.bf16.msra.mxu0 0
    %113 = vmatprep.subr.bf16.mxu0 0
    %114 = vmatpush1.bf16.msra.mxu0 0
    %115 = vmatprep.subr.bf16.mxu0 0
    %116 = vmatpush1.bf16.msra.mxu0 0
    %117 = vmatprep.subr.bf16.mxu0 0
    %118 = vmatpush1.bf16.msra.mxu0 0
    %119 = vmatprep.subr.bf16.mxu0 0
    %120 = vmatpush1.bf16.msra.mxu0 0
    %121 = vmatprep.subr.bf16.mxu0 0
    %122 = vmatpush1.bf16.msra.mxu0 0
    %123 = vmatprep.subr.bf16.mxu0 0
    %124 = vmatpush1.bf16.msra.mxu0 0
    %125 = vmatprep.subr.bf16.mxu0 0
    %126 = vmatpush1.bf16.msra.mxu0 0
    %127 = vmatprep.subr.bf16.mxu0 0
    %128 = vmatpush1.bf16.msra.mxu0 0
    %129 = vmatprep.subr.bf16.mxu0 0
    %130 = vmatpush1.bf16.msra.mxu0 0
    %131 = vmatprep.subr.bf16.mxu0 0
    %132 = vmatpush1.bf16.msra.mxu0 0
    %133 = vmatprep.subr.bf16.mxu0 0
    %134 = vmatpush1.bf16.msra.mxu0 0
    %135 = vmatprep.subr.bf16.mxu0 0
    %136 = vmatpush1.bf16.msra.mxu0 0
    %137 = vmatprep.subr.bf16.mxu0 0
    %138 = vmatpush1.bf16.msra.mxu0 0
    %139 = vmatprep.mubr.bf16.mxu0 0
    %140 = vmatmul.mubr.bf16.gmra.mrb[0].mxu0 %v98
    %v141 = vpop.f32.mrb[0].mxu0
    %v142 = vadd.f32 %v84, %v141
    %v143 = vpop.f32.mrb[0].mxu0
    %v144 = vadd.f32 %v88, %v143
    %v145 = vpop.f32.mrb[0].mxu0
    %v146 = vadd.f32 %v84, %v145
    %v147 = vpop.f32.mrb[0].mxu0
    %v148 = vadd.f32 %v88, %v147
    %149 = vdwg.mxu0
    %v150 = vmax.f32 %v142, 0.0
    %v151 = vmax.f32 %v144, 0.0
    %v152 = vmax.f32 %v146, 0.0
    %v153 = vmax.f32 %v148, 0.0
    %v154 = vpack.c.bf16 %v152, %v150
    %v155 = vpack.c.bf16 %v153, %v151
    %v156 = vld [vmem:[#allocation2] sm:$0xff]
    %v157 = vld [vmem:[#allocation2 + $0x8] sm:$0xff]
    %v158 = vld [vmem:[#allocation2 + $0x10] sm:$0xff]
    %v159 = vld [vmem:[#allocation2 + $0x18] sm:$0xff]
    %v160 = vld [vmem:[#allocation2 + $0x20] sm:$0xff]
    %v161 = vld [vmem:[#allocation2 + $0x28] sm:$0xff]
    %v162 = vld [vmem:[#allocation2 + $0x30] sm:$0xff]
    %v163 = vld [vmem:[#allocation2 + $0x38] sm:$0xff]
    %v164 = vld [vmem:[#allocation2 + $0x40] sm:$0xff]
    %v165 = vld [vmem:[#allocation2 + $0x48] sm:$0xff]
    %v166 = vld [vmem:[#allocation2 + $0x50] sm:$0xff]
    %v167 = vld [vmem:[#allocation2 + $0x58] sm:$0xff]
    %v168 = vld [vmem:[#allocation2 + $0x60] sm:$0xff]
    %v169 = vld [vmem:[#allocation2 + $0x68] sm:$0xff]
    %v170 = vld [vmem:[#allocation2 + $0x70] sm:$0xff]
    %v171 = vld [vmem:[#allocation2 + $0x78] sm:$0xff]
    %v172 = vld [vmem:[#allocation2 + $0x80] sm:$0xff]
    %v173 = vld [vmem:[#allocation2 + $0x88] sm:$0xff]
    %v174 = vld [vmem:[#allocation2 + $0x90] sm:$0xff]
    %v175 = vld [vmem:[#allocation2 + $0x98] sm:$0xff]
    %v176 = vld [vmem:[#allocation2 + $0xa0] sm:$0xff]
    %v177 = vld [vmem:[#allocation2 + $0xa8] sm:$0xff]
    %v178 = vld [vmem:[#allocation2 + $0xb0] sm:$0xff]
    %v179 = vld [vmem:[#allocation2 + $0xb8] sm:$0xff]
    %v180 = vld [vmem:[#allocation2 + $0xc0] sm:$0xff]
    %v181 = vld [vmem:[#allocation2 + $0xc8] sm:$0xff]
    %v182 = vld [vmem:[#allocation2 + $0xd0] sm:$0xff]
    %v183 = vld [vmem:[#allocation2 + $0xd8] sm:$0xff]
    %v184 = vld [vmem:[#allocation2 + $0xe0] sm:$0xff]
    %v185 = vld [vmem:[#allocation2 + $0xe8] sm:$0xff]
    %v186 = vld [vmem:[#allocation2 + $0xf0] sm:$0xff]
    %v187 = vld [vmem:[#allocation2 + $0xf8] sm:$0xff]
    %v188 = vld [vmem:[%s4] sm:$0x3]
    %v190 = vlaneseq
    %v191 = vshrl.u32 %v190, 7
    %v192 = vsub.s32 0, %v191
    %v193 = vrot.slane %v188, %v192
    %v194 = vlaneseq
    %v195 = vshrl.u32 %v194, 7
    %v196 = vsub.s32 1, %v195
    %v197 = vrot.slane %v188, %v196
    %v232 = vunpack.c.l.b16 %v156
    %v233 = vunpack.c.h.b16 %v156
    %v234 = vunpack.c.l.b16 %v157
    %v235 = vunpack.c.h.b16 %v157
    %v236 = vunpack.c.l.b16 %v158
    %v237 = vunpack.c.h.b16 %v158
    %v238 = vunpack.c.l.b16 %v159
    %v239 = vunpack.c.h.b16 %v159
    %v240 = vunpack.c.l.b16 %v160
    %v241 = vunpack.c.h.b16 %v160
    %v242 = vunpack.c.l.b16 %v161
    %v243 = vunpack.c.h.b16 %v161
    %v244 = vunpack.c.l.b16 %v162
    %v245 = vunpack.c.h.b16 %v162
    %v246 = vunpack.c.l.b16 %v163
    %v247 = vunpack.c.h.b16 %v163
    %v248 = vunpack.c.l.b16 %v164
    %v249 = vunpack.c.h.b16 %v164
    %v250 = vunpack.c.l.b16 %v165
    %v251 = vunpack.c.h.b16 %v165
    %v252 = vunpack.c.l.b16 %v166
    %v253 = vunpack.c.h.b16 %v166
    %v254 = vunpack.c.l.b16 %v167
    %v255 = vunpack.c.h.b16 %v167
    %v256 = vunpack.c.l.b16 %v168
    %v257 = vunpack.c.h.b16 %v168
    %v258 = vunpack.c.l.b16 %v169
    %v259 = vunpack.c.h.b16 %v169
    %v260 = vunpack.c.l.b16 %v170
    %v261 = vunpack.c.h.b16 %v170
    %v262 = vunpack.c.l.b16 %v171
    %v263 = vunpack.c.h.b16 %v171
    %v264 = vunpack.c.l.b16 %v172
    %v265 = vunpack.c.h.b16 %v172
    %v266 = vunpack.c.l.b16 %v173
    %v267 = vunpack.c.h.b16 %v173
    %v268 = vunpack.c.l.b16 %v174
    %v269 = vunpack.c.h.b16 %v174
    %v270 = vunpack.c.l.b16 %v175
    %v271 = vunpack.c.h.b16 %v175
    %v272 = vunpack.c.l.b16 %v176
    %v273 = vunpack.c.h.b16 %v176
    %v274 = vunpack.c.l.b16 %v177
    %v275 = vunpack.c.h.b16 %v177
    %v276 = vunpack.c.l.b16 %v178
    %v277 = vunpack.c.h.b16 %v178
    %v278 = vunpack.c.l.b16 %v179
    %v279 = vunpack.c.h.b16 %v179
    %v280 = vunpack.c.l.b16 %v180
    %v281 = vunpack.c.h.b16 %v180
    %v282 = vunpack.c.l.b16 %v181
    %v283 = vunpack.c.h.b16 %v181
    %v284 = vunpack.c.l.b16 %v182
    %v285 = vunpack.c.h.b16 %v182
    %v286 = vunpack.c.l.b16 %v183
    %v287 = vunpack.c.h.b16 %v183
    %v288 = vunpack.c.l.b16 %v184
    %v289 = vunpack.c.h.b16 %v184
    %v290 = vunpack.c.l.b16 %v185
    %v291 = vunpack.c.h.b16 %v185
    %v292 = vunpack.c.l.b16 %v186
    %v293 = vunpack.c.h.b16 %v186
    %v294 = vunpack.c.l.b16 %v187
    %v295 = vunpack.c.h.b16 %v187
    %v296 = vpack.c.b16 %v234, %v232
    %v297 = vpack.c.b16 %v235, %v233
    %v298 = vpack.c.b16 %v238, %v236
    %v299 = vpack.c.b16 %v239, %v237
    %v300 = vpack.c.b16 %v242, %v240
    %v301 = vpack.c.b16 %v243, %v241
    %v302 = vpack.c.b16 %v246, %v244
    %v303 = vpack.c.b16 %v247, %v245
    %v304 = vpack.c.b16 %v250, %v248
    %v305 = vpack.c.b16 %v251, %v249
    %v306 = vpack.c.b16 %v254, %v252
    %v307 = vpack.c.b16 %v255, %v253
    %v308 = vpack.c.b16 %v258, %v256
    %v309 = vpack.c.b16 %v259, %v257
    %v310 = vpack.c.b16 %v262, %v260
    %v311 = vpack.c.b16 %v263, %v261
    %v312 = vpack.c.b16 %v266, %v264
    %v313 = vpack.c.b16 %v267, %v265
    %v314 = vpack.c.b16 %v270, %v268
    %v315 = vpack.c.b16 %v271, %v269
    %v316 = vpack.c.b16 %v274, %v272
    %v317 = vpack.c.b16 %v275, %v273
    %v318 = vpack.c.b16 %v278, %v276
    %v319 = vpack.c.b16 %v279, %v277
    %v320 = vpack.c.b16 %v282, %v280
    %v321 = vpack.c.b16 %v283, %v281
    %v322 = vpack.c.b16 %v286, %v284
    %v323 = vpack.c.b16 %v287, %v285
    %v324 = vpack.c.b16 %v290, %v288
    %v325 = vpack.c.b16 %v291, %v289
    %v326 = vpack.c.b16 %v294, %v292
    %v327 = vpack.c.b16 %v295, %v293
    %360 = vmatprep.subr.bf16.mxu0 %v297
    %361 = vmatpush1.bf16.msra.mxu0 %v296
    %362 = vmatprep.subr.bf16.mxu0 %v299
    %363 = vmatpush1.bf16.msra.mxu0 %v298
    %364 = vmatprep.subr.bf16.mxu0 %v301
    %365 = vmatpush1.bf16.msra.mxu0 %v300
    %366 = vmatprep.subr.bf16.mxu0 %v303
    %367 = vmatpush1.bf16.msra.mxu0 %v302
    %368 = vmatprep.subr.bf16.mxu0 %v305
    %369 = vmatpush1.bf16.msra.mxu0 %v304
    %370 = vmatprep.subr.bf16.mxu0 %v307
    %371 = vmatpush1.bf16.msra.mxu0 %v306
    %372 = vmatprep.subr.bf16.mxu0 %v309
    %373 = vmatpush1.bf16.msra.mxu0 %v308
    %374 = vmatprep.subr.bf16.mxu0 %v311
    %375 = vmatpush1.bf16.msra.mxu0 %v310
    %376 = vmatprep.subr.bf16.mxu0 %v313
    %377 = vmatpush1.bf16.msra.mxu0 %v312
    %378 = vmatprep.subr.bf16.mxu0 %v315
    %379 = vmatpush1.bf16.msra.mxu0 %v314
    %380 = vmatprep.subr.bf16.mxu0 %v317
    %381 = vmatpush1.bf16.msra.mxu0 %v316
    %382 = vmatprep.subr.bf16.mxu0 %v319
    %383 = vmatpush1.bf16.msra.mxu0 %v318
    %384 = vmatprep.subr.bf16.mxu0 %v321
    %385 = vmatpush1.bf16.msra.mxu0 %v320
    %386 = vmatprep.subr.bf16.mxu0 %v323
    %387 = vmatpush1.bf16.msra.mxu0 %v322
    %388 = vmatprep.subr.bf16.mxu0 %v325
    %389 = vmatpush1.bf16.msra.mxu0 %v324
    %390 = vmatprep.subr.bf16.mxu0 %v327
    %391 = vmatpush1.bf16.msra.mxu0 %v326
    %392 = vmatprep.mubr.bf16.mxu0 %v155
    %393 = vmatmul.mubr.bf16.gmra.mrb[0].mxu0 %v154
    %v394 = vpop.f32.mrb[0].mxu0
    %v395 = vadd.f32 %v193, %v394
    %v396 = vpop.f32.mrb[0].mxu0
    %v397 = vadd.f32 %v197, %v396
    %v398 = vpop.f32.mrb[0].mxu0
    %v399 = vadd.f32 %v193, %v398
    %v400 = vpop.f32.mrb[0].mxu0
    %v401 = vadd.f32 %v197, %v400
    %402 = vdwg.mxu0
    %v403 = vmax.f32 %v395, 0.0
    %v404 = vmax.f32 %v397, 0.0
    %v405 = vmax.f32 %v399, 0.0
    %v406 = vmax.f32 %v401, 0.0
    %v407 = vpack.c.bf16 %v405, %v403
    %v408 = vpack.c.bf16 %v406, %v404
    %v409 = vld [vmem:[#allocation5] sm:$0xff]
    %v410 = vld [vmem:[#allocation5 + $0x8] sm:$0xff]
    %v411 = vld [vmem:[#allocation5 + $0x10] sm:$0xff]
    %v412 = vld [vmem:[#allocation5 + $0x18] sm:$0xff]
    %v413 = vld [vmem:[#allocation5 + $0x20] sm:$0xff]
    %v414 = vld [vmem:[#allocation5 + $0x28] sm:$0xff]
    %v415 = vld [vmem:[#allocation5 + $0x30] sm:$0xff]
    %v416 = vld [vmem:[#allocation5 + $0x38] sm:$0xff]
    %v417 = vld [vmem:[#allocation5 + $0x40] sm:$0xff]
    %v418 = vld [vmem:[#allocation5 + $0x48] sm:$0xff]
    %v419 = vld [vmem:[#allocation5 + $0x50] sm:$0xff]
    %v420 = vld [vmem:[#allocation5 + $0x58] sm:$0xff]
    %v421 = vld [vmem:[#allocation5 + $0x60] sm:$0xff]
    %v422 = vld [vmem:[#allocation5 + $0x68] sm:$0xff]
    %v423 = vld [vmem:[#allocation5 + $0x70] sm:$0xff]
    %v424 = vld [vmem:[#allocation5 + $0x78] sm:$0xff]
    %v425 = vld [vmem:[#allocation5 + $0x80] sm:$0xff]
    %v426 = vld [vmem:[#allocation5 + $0x88] sm:$0xff]
    %v427 = vld [vmem:[#allocation5 + $0x90] sm:$0xff]
    %v428 = vld [vmem:[#allocation5 + $0x98] sm:$0xff]
    %v429 = vld [vmem:[#allocation5 + $0xa0] sm:$0xff]
    %v430 = vld [vmem:[#allocation5 + $0xa8] sm:$0xff]
    %v431 = vld [vmem:[#allocation5 + $0xb0] sm:$0xff]
    %v432 = vld [vmem:[#allocation5 + $0xb8] sm:$0xff]
    %v433 = vld [vmem:[#allocation5 + $0xc0] sm:$0xff]
    %v434 = vld [vmem:[#allocation5 + $0xc8] sm:$0xff]
    %v435 = vld [vmem:[#allocation5 + $0xd0] sm:$0xff]
    %v436 = vld [vmem:[#allocation5 + $0xd8] sm:$0xff]
    %v437 = vld [vmem:[#allocation5 + $0xe0] sm:$0xff]
    %v438 = vld [vmem:[#allocation5 + $0xe8] sm:$0xff]
    %v439 = vld [vmem:[#allocation5 + $0xf0] sm:$0xff]
    %v440 = vld [vmem:[#allocation5 + $0xf8] sm:$0xff]
    %v441 = vld [vmem:[%s6] sm:$0x3]
    %v443 = vlaneseq
    %v444 = vshrl.u32 %v443, 7
    %v445 = vsub.s32 0, %v444
    %v446 = vrot.slane %v441, %v445
    %v447 = vlaneseq
    %v448 = vshrl.u32 %v447, 7
    %v449 = vsub.s32 1, %v448
    %v450 = vrot.slane %v441, %v449
    %v485 = vunpack.c.l.b16 %v409
    %v486 = vunpack.c.h.b16 %v409
    %v487 = vunpack.c.l.b16 %v410
    %v488 = vunpack.c.h.b16 %v410
    %v489 = vunpack.c.l.b16 %v411
    %v490 = vunpack.c.h.b16 %v411
    %v491 = vunpack.c.l.b16 %v412
    %v492 = vunpack.c.h.b16 %v412
    %v493 = vunpack.c.l.b16 %v413
    %v494 = vunpack.c.h.b16 %v413
    %v495 = vunpack.c.l.b16 %v414
    %v496 = vunpack.c.h.b16 %v414
    %v497 = vunpack.c.l.b16 %v415
    %v498 = vunpack.c.h.b16 %v415
    %v499 = vunpack.c.l.b16 %v416
    %v500 = vunpack.c.h.b16 %v416
    %v501 = vunpack.c.l.b16 %v417
    %v502 = vunpack.c.h.b16 %v417
    %v503 = vunpack.c.l.b16 %v418
    %v504 = vunpack.c.h.b16 %v418
    %v505 = vunpack.c.l.b16 %v419
    %v506 = vunpack.c.h.b16 %v419
    %v507 = vunpack.c.l.b16 %v420
    %v508 = vunpack.c.h.b16 %v420
    %v509 = vunpack.c.l.b16 %v421
    %v510 = vunpack.c.h.b16 %v421
    %v511 = vunpack.c.l.b16 %v422
    %v512 = vunpack.c.h.b16 %v422
    %v513 = vunpack.c.l.b16 %v423
    %v514 = vunpack.c.h.b16 %v423
    %v515 = vunpack.c.l.b16 %v424
    %v516 = vunpack.c.h.b16 %v424
    %v517 = vunpack.c.l.b16 %v425
    %v518 = vunpack.c.h.b16 %v425
    %v519 = vunpack.c.l.b16 %v426
    %v520 = vunpack.c.h.b16 %v426
    %v521 = vunpack.c.l.b16 %v427
    %v522 = vunpack.c.h.b16 %v427
    %v523 = vunpack.c.l.b16 %v428
    %v524 = vunpack.c.h.b16 %v428
    %v525 = vunpack.c.l.b16 %v429
    %v526 = vunpack.c.h.b16 %v429
    %v527 = vunpack.c.l.b16 %v430
    %v528 = vunpack.c.h.b16 %v430
    %v529 = vunpack.c.l.b16 %v431
    %v530 = vunpack.c.h.b16 %v431
    %v531 = vunpack.c.l.b16 %v432
    %v532 = vunpack.c.h.b16 %v432
    %v533 = vunpack.c.l.b16 %v433
    %v534 = vunpack.c.h.b16 %v433
    %v535 = vunpack.c.l.b16 %v434
    %v536 = vunpack.c.h.b16 %v434
    %v537 = vunpack.c.l.b16 %v435
    %v538 = vunpack.c.h.b16 %v435
    %v539 = vunpack.c.l.b16 %v436
    %v540 = vunpack.c.h.b16 %v436
    %v541 = vunpack.c.l.b16 %v437
    %v542 = vunpack.c.h.b16 %v437
    %v543 = vunpack.c.l.b16 %v438
    %v544 = vunpack.c.h.b16 %v438
    %v545 = vunpack.c.l.b16 %v439
    %v546 = vunpack.c.h.b16 %v439
    %v547 = vunpack.c.l.b16 %v440
    %v548 = vunpack.c.h.b16 %v440
    %v549 = vpack.c.b16 %v487, %v485
    %v550 = vpack.c.b16 %v488, %v486
    %v551 = vpack.c.b16 %v491, %v489
    %v552 = vpack.c.b16 %v492, %v490
    %v553 = vpack.c.b16 %v495, %v493
    %v554 = vpack.c.b16 %v496, %v494
    %v555 = vpack.c.b16 %v499, %v497
    %v556 = vpack.c.b16 %v500, %v498
    %v557 = vpack.c.b16 %v503, %v501
    %v558 = vpack.c.b16 %v504, %v502
    %v559 = vpack.c.b16 %v507, %v505
    %v560 = vpack.c.b16 %v508, %v506
    %v561 = vpack.c.b16 %v511, %v509
    %v562 = vpack.c.b16 %v512, %v510
    %v563 = vpack.c.b16 %v515, %v513
    %v564 = vpack.c.b16 %v516, %v514
    %v565 = vpack.c.b16 %v519, %v517
    %v566 = vpack.c.b16 %v520, %v518
    %v567 = vpack.c.b16 %v523, %v521
    %v568 = vpack.c.b16 %v524, %v522
    %v569 = vpack.c.b16 %v527, %v525
    %v570 = vpack.c.b16 %v528, %v526
    %v571 = vpack.c.b16 %v531, %v529
    %v572 = vpack.c.b16 %v532, %v530
    %v573 = vpack.c.b16 %v535, %v533
    %v574 = vpack.c.b16 %v536, %v534
    %v575 = vpack.c.b16 %v539, %v537
    %v576 = vpack.c.b16 %v540, %v538
    %v577 = vpack.c.b16 %v543, %v541
    %v578 = vpack.c.b16 %v544, %v542
    %v579 = vpack.c.b16 %v547, %v545
    %v580 = vpack.c.b16 %v548, %v546
    %613 = vmatprep.subr.bf16.mxu0 %v550
    %614 = vmatpush1.bf16.msra.mxu0 %v549
    %615 = vmatprep.subr.bf16.mxu0 %v552
    %616 = vmatpush1.bf16.msra.mxu0 %v551
    %617 = vmatprep.subr.bf16.mxu0 %v554
    %618 = vmatpush1.bf16.msra.mxu0 %v553
    %619 = vmatprep.subr.bf16.mxu0 %v556
    %620 = vmatpush1.bf16.msra.mxu0 %v555
    %621 = vmatprep.subr.bf16.mxu0 %v558
    %622 = vmatpush1.bf16.msra.mxu0 %v557
    %623 = vmatprep.subr.bf16.mxu0 %v560
    %624 = vmatpush1.bf16.msra.mxu0 %v559
    %625 = vmatprep.subr.bf16.mxu0 %v562
    %626 = vmatpush1.bf16.msra.mxu0 %v561
    %627 = vmatprep.subr.bf16.mxu0 %v564
    %628 = vmatpush1.bf16.msra.mxu0 %v563
    %629 = vmatprep.subr.bf16.mxu0 %v566
    %630 = vmatpush1.bf16.msra.mxu0 %v565
    %631 = vmatprep.subr.bf16.mxu0 %v568
    %632 = vmatpush1.bf16.msra.mxu0 %v567
    %633 = vmatprep.subr.bf16.mxu0 %v570
    %634 = vmatpush1.bf16.msra.mxu0 %v569
    %635 = vmatprep.subr.bf16.mxu0 %v572
    %636 = vmatpush1.bf16.msra.mxu0 %v571
    %637 = vmatprep.subr.bf16.mxu0 %v574
    %638 = vmatpush1.bf16.msra.mxu0 %v573
    %639 = vmatprep.subr.bf16.mxu0 %v576
    %640 = vmatpush1.bf16.msra.mxu0 %v575
    %641 = vmatprep.subr.bf16.mxu0 %v578
    %642 = vmatpush1.bf16.msra.mxu0 %v577
    %643 = vmatprep.subr.bf16.mxu0 %v580
    %644 = vmatpush1.bf16.msra.mxu0 %v579
    %645 = vmatprep.mubr.bf16.mxu0 %v408
    %646 = vmatmul.mubr.bf16.gmra.mrb[0].mxu0 %v407
    %v647 = vpop.f32.mrb[0].mxu0
    %v648 = vadd.f32 %v446, %v647
    %v649 = vpop.f32.mrb[0].mxu0
    %v650 = vadd.f32 %v450, %v649
    %v651 = vpop.f32.mrb[0].mxu0
    %v652 = vadd.f32 %v446, %v651
    %v653 = vpop.f32.mrb[0].mxu0
    %v654 = vadd.f32 %v450, %v653
    %655 = vdwg.mxu0
    %v656 = vmax.f32 %v648, 0.0
    %v657 = vmax.f32 %v650, 0.0
    %v658 = vmax.f32 %v652, 0.0
    %v659 = vmax.f32 %v654, 0.0
    %v660 = vpack.c.bf16 %v658, %v656
    %v661 = vpack.c.bf16 %v659, %v657
    %v662 = vld [vmem:[#allocation7] sm:$0xf]
    %v663 = vld [vmem:[#allocation7 + $0x4] sm:$0xf]
    %v664 = vld [vmem:[#allocation7 + $0x8] sm:$0xf]
    %v665 = vld [vmem:[#allocation7 + $0xc] sm:$0xf]
    %v666 = vld [vmem:[#allocation7 + $0x10] sm:$0xf]
    %v667 = vld [vmem:[#allocation7 + $0x14] sm:$0xf]
    %v668 = vld [vmem:[#allocation7 + $0x18] sm:$0xf]
    %v669 = vld [vmem:[#allocation7 + $0x1c] sm:$0xf]
    %v670 = vld [vmem:[#allocation7 + $0x20] sm:$0xf]
    %v671 = vld [vmem:[#allocation7 + $0x24] sm:$0xf]
    %v672 = vld [vmem:[#allocation7 + $0x28] sm:$0xf]
    %v673 = vld [vmem:[#allocation7 + $0x2c] sm:$0xf]
    %v674 = vld [vmem:[#allocation7 + $0x30] sm:$0xf]
    %v675 = vld [vmem:[#allocation7 + $0x34] sm:$0xf]
    %v676 = vld [vmem:[#allocation7 + $0x38] sm:$0xf]
    %v677 = vld [vmem:[#allocation7 + $0x3c] sm:$0xf]
    %v678 = vld [vmem:[#allocation7 + $0x40] sm:$0xf]
    %v679 = vld [vmem:[#allocation7 + $0x44] sm:$0xf]
    %v680 = vld [vmem:[#allocation7 + $0x48] sm:$0xf]
    %v681 = vld [vmem:[#allocation7 + $0x4c] sm:$0xf]
    %v682 = vld [vmem:[#allocation7 + $0x50] sm:$0xf]
    %v683 = vld [vmem:[#allocation7 + $0x54] sm:$0xf]
    %v684 = vld [vmem:[#allocation7 + $0x58] sm:$0xf]
    %v685 = vld [vmem:[#allocation7 + $0x5c] sm:$0xf]
    %v686 = vld [vmem:[#allocation7 + $0x60] sm:$0xf]
    %v687 = vld [vmem:[#allocation7 + $0x64] sm:$0xf]
    %v688 = vld [vmem:[#allocation7 + $0x68] sm:$0xf]
    %v689 = vld [vmem:[#allocation7 + $0x6c] sm:$0xf]
    %v690 = vld [vmem:[#allocation7 + $0x70] sm:$0xf]
    %v691 = vld [vmem:[#allocation7 + $0x74] sm:$0xf]
    %v692 = vld [vmem:[#allocation7 + $0x78] sm:$0xf]
    %v693 = vld [vmem:[#allocation7 + $0x7c] sm:$0xf]
    %v694 = vld [vmem:[%s8] sm:$0x1]
    %v696 = vlaneseq
    %v697 = vshrl.u32 %v696, 7
    %v698 = vsub.s32 0, %v697
    %v699 = vrot.slane %v694, %v698
    %v733 = vunpack.c.l.b16 %v662
    %v734 = vunpack.c.l.b16 %v663
    %v735 = vunpack.c.l.b16 %v664
    %v736 = vunpack.c.l.b16 %v665
    %v737 = vunpack.c.l.b16 %v666
    %v738 = vunpack.c.l.b16 %v667
    %v739 = vunpack.c.l.b16 %v668
    %v740 = vunpack.c.l.b16 %v669
    %v741 = vunpack.c.l.b16 %v670
    %v742 = vunpack.c.l.b16 %v671
    %v743 = vunpack.c.l.b16 %v672
    %v744 = vunpack.c.l.b16 %v673
    %v745 = vunpack.c.l.b16 %v674
    %v746 = vunpack.c.l.b16 %v675
    %v747 = vunpack.c.l.b16 %v676
    %v748 = vunpack.c.l.b16 %v677
    %v749 = vunpack.c.l.b16 %v678
    %v750 = vunpack.c.l.b16 %v679
    %v751 = vunpack.c.l.b16 %v680
    %v752 = vunpack.c.l.b16 %v681
    %v753 = vunpack.c.l.b16 %v682
    %v754 = vunpack.c.l.b16 %v683
    %v755 = vunpack.c.l.b16 %v684
    %v756 = vunpack.c.l.b16 %v685
    %v757 = vunpack.c.l.b16 %v686
    %v758 = vunpack.c.l.b16 %v687
    %v759 = vunpack.c.l.b16 %v688
    %v760 = vunpack.c.l.b16 %v689
    %v761 = vunpack.c.l.b16 %v690
    %v762 = vunpack.c.l.b16 %v691
    %v763 = vunpack.c.l.b16 %v692
    %v764 = vunpack.c.l.b16 %v693
    %v765 = vpack.c.b16 %v734, %v733
    %v766 = vpack.c.b16 %v736, %v735
    %v767 = vpack.c.b16 %v738, %v737
    %v768 = vpack.c.b16 %v740, %v739
    %v769 = vpack.c.b16 %v742, %v741
    %v770 = vpack.c.b16 %v744, %v743
    %v771 = vpack.c.b16 %v746, %v745
    %v772 = vpack.c.b16 %v748, %v747
    %v773 = vpack.c.b16 %v750, %v749
    %v774 = vpack.c.b16 %v752, %v751
    %v775 = vpack.c.b16 %v754, %v753
    %v776 = vpack.c.b16 %v756, %v755
    %v777 = vpack.c.b16 %v758, %v757
    %v778 = vpack.c.b16 %v760, %v759
    %v779 = vpack.c.b16 %v762, %v761
    %v780 = vpack.c.b16 %v764, %v763
    %797 = vmatprep.subr.bf16.mxu0 0
    %798 = vmatpush1.bf16.msra.mxu0 %v765
    %799 = vmatprep.subr.bf16.mxu0 0
    %800 = vmatpush1.bf16.msra.mxu0 %v766
    %801 = vmatprep.subr.bf16.mxu0 0
    %802 = vmatpush1.bf16.msra.mxu0 %v767
    %803 = vmatprep.subr.bf16.mxu0 0
    %804 = vmatpush1.bf16.msra.mxu0 %v768
    %805 = vmatprep.subr.bf16.mxu0 0
    %806 = vmatpush1.bf16.msra.mxu0 %v769
    %807 = vmatprep.subr.bf16.mxu0 0
    %808 = vmatpush1.bf16.msra.mxu0 %v770
    %809 = vmatprep.subr.bf16.mxu0 0
    %810 = vmatpush1.bf16.msra.mxu0 %v771
    %811 = vmatprep.subr.bf16.mxu0 0
    %812 = vmatpush1.bf16.msra.mxu0 %v772
    %813 = vmatprep.subr.bf16.mxu0 0
    %814 = vmatpush1.bf16.msra.mxu0 %v773
    %815 = vmatprep.subr.bf16.mxu0 0
    %816 = vmatpush1.bf16.msra.mxu0 %v774
    %817 = vmatprep.subr.bf16.mxu0 0
    %818 = vmatpush1.bf16.msra.mxu0 %v775
    %819 = vmatprep.subr.bf16.mxu0 0
    %820 = vmatpush1.bf16.msra.mxu0 %v776
    %821 = vmatprep.subr.bf16.mxu0 0
    %822 = vmatpush1.bf16.msra.mxu0 %v777
    %823 = vmatprep.subr.bf16.mxu0 0
    %824 = vmatpush1.bf16.msra.mxu0 %v778
    %825 = vmatprep.subr.bf16.mxu0 0
    %826 = vmatpush1.bf16.msra.mxu0 %v779
    %827 = vmatprep.subr.bf16.mxu0 0
    %828 = vmatpush1.bf16.msra.mxu0 %v780
    %829 = vmatprep.mubr.bf16.mxu0 %v661
    %830 = vmatmul.mubr.bf16.gmra.mrb[0].mxu0 %v660
    %v831 = vpop.f32.mrb[0].mxu0
    %v832 = vadd.f32 %v699, %v831
    %v833 = vpop.f32.mrb[0].mxu0
    %v834 = vpop.f32.mrb[0].mxu0
    %v835 = vadd.f32 %v699, %v834
    %v836 = vpop.f32.mrb[0].mxu0
    %837 = vdwg.mxu0
    %v838 = vtanh.pop %v832
    %v839 = vtanh.pop %v835
    %v840 = vmul.f32 %v838, 2.0
    %v841 = vmul.f32 %v839, 2.0
    %v842 = vpack.c.bf16 %v841, %v840
    %v844 = vunpack.c.l.b16 %v842
    %v845 = vunpack.c.h.b16 %v842
    %v846 = vpack.c.b16 %v844, %v844
    %v847 = vpack.c.b16 %v845, %v845
    %850 = vst [vmem:[#allocation8] sm:$0xf] %v846
    %851 = vst [vmem:[#allocation8 + $0x4] sm:$0xf] %v847
    // Predicated region
    $region50: #{tpu_custom_call.1} parent=1 // pred_check
      _
    $region51: #{tpu_custom_call.1} parent=1 // pred_check_branch
      %853 = sbr.rel (0) target = $region53
    $region52: #{tpu_custom_call.1} parent=1 // pred_region
      %s855 = ssub.s32 128, 128
      %856 = vsyncadd [#allocation4], %s855
      %s857 = sshll.u32 [#allocation8], 4
      %s858 = int_to_ptr.vmem [resolvable:$true] %s857
      %863 = dma.vmem_to_hbm [thread:$0]  %s858, 128, %s9, [#allocation4], 64, 64, 4
    $region53: #{tpu_custom_call.1} parent=1 // pred_fallthru
      _
    // Predicated region
    $region54: #{tpu_custom_call.1} parent=1 // pred_check
      _
    $region55: #{tpu_custom_call.1} parent=1 // pred_check_branch
      %865 = sbr.rel (0) target = $region57
    $region56: #{tpu_custom_call.1} parent=1 // pred_region
      %866 = dma.done [#allocation4], 128
    $region57: #{tpu_custom_call.1} parent=1 // pred_fallthru
      _
    %867 = vsyncpa [#allocation3], 1
    %868 = vsyncpa [#allocation6], 1
    %869 = vsyncpa [#allocation4], 1

</llo_original>
